<compile_context>
chip_gen: v6e
topology: v6e:2x2x1
jax: 0.10.0
libtpu: 0.0.40
codegen_flags: <defaults>
</compile_context>

<pallas_src>
import functools

import jax
import jax.numpy as jnp
from jax.experimental import pallas as pl
from jax.experimental.pallas import tpu as pltpu


def _basic_block_kernel(H, W, C, Cout,
                        x_ref, w1_ref, s1_ref, b1_ref, w2_ref, s2_ref, b2_ref,
                        o_ref, pad_ref):
    """One batch element per grid step.

    x_ref:   (1, C, HW)        input, NCHW with HW flattened (f32, lane-dense)
    w1_ref:  (Cout, 9*C)       conv1 weights, tap-major contraction axis (bf16)
    s1_ref:  (Cout, 1)         BN1 scale (f32)
    b1_ref:  (Cout, 1)         BN1 shift (f32)
    w2_ref:  (Cout, 9*Cout)    conv2 weights (bf16)
    s2_ref:  (Cout, 1)         BN2 scale (f32)
    b2_ref:  (Cout, 1)         BN2 shift (f32)
    o_ref:   (1, Cout, HW)     output (f32, lane-dense store)
    pad_ref: (C, HW + 2*(W+1)) bf16 flat padded scratch, reused by both convs
    """
    HW = H * W
    P = W + 1                      # zero-halo width on each side of the buffer

    x = x_ref[0]                   # (C, HW) f32, lane-dense load

    # Column-position masks (compile-time iota).  A dx==0 tap must not read the
    # previous row's last pixel (lane shift wraps across rows); dx==2 must not
    # read the next row's first pixel.  Row (dy) OOB is handled by the zero
    # halo of the flat padded buffer.
    col = jax.lax.broadcasted_iota(jnp.int32, (1, HW), 1) % W
    not_left = col > 0
    not_right = col < (W - 1)

    def conv3x3_T(wT_ref):
        # Transposed im2col: rows are (tap-major, channel) shifted copies of
        # the padded source -> (9*C, HW) bf16, then one MXU matmul.
        rows = []
        for dy in range(3):
            for dx in range(3):
                s = (dy - 1) * W + (dx - 1)
                tap = pad_ref[:, P + s:P + s + HW]                # (C, HW) bf16
                if dx == 0:
                    tap = jnp.where(not_left, tap, jnp.zeros_like(tap))
                elif dx == 2:
                    tap = jnp.where(not_right, tap, jnp.zeros_like(tap))
                rows.append(tap)
        slab = jnp.concatenate(rows, axis=0)                      # (9*C, HW)
        return jnp.dot(wT_ref[...], slab,
                       preferred_element_type=jnp.float32)        # (Cout, HW)

    # Re-zero the padded buffer every step: with a "parallel" batch axis each
    # TensorCore owns its own scratch, so a program_id==0 one-time zero would
    # be unsafe.  It is a single tiny (C, HW+2P) bf16 store.
    pad_ref[...] = jnp.zeros_like(pad_ref)
    pad_ref[:, P:P + HW] = x.astype(jnp.bfloat16)

    # ---- conv1 (3x3, s=1, p=1) -> BN1 (f32 scale/shift on the f32 acc) -> ReLU
    out1 = jnp.maximum(conv3x3_T(w1_ref) * s1_ref[...] + b1_ref[...], 0.0)

    # ---- conv2 (3x3, s=1, p=1) -> BN2 (interior overwritten, halo stays zero)
    pad_ref[:, P:P + HW] = out1.astype(jnp.bfloat16)
    out2 = conv3x3_T(w2_ref) * s2_ref[...] + b2_ref[...]

    # ---- identity shortcut + ReLU; single lane-dense (Cout, HW) store ----
    o_ref[0] = jnp.maximum(out2 + x, 0.0).astype(o_ref.dtype)


def basic_block_forward(x_nchw, w1_oihw, s1, b1, w2_oihw, s2, b2):
    """BasicBlock forward (stride=1, dilation=1, downsample=None), eval-mode BN.

    x_nchw:  (N, C, H, W) float32, PyTorch layout.
    w*_oihw: (Cout, Cin, 3, 3) conv weights (nn.Conv2d(..., bias=False)).
    s*/b*:   per-channel BN scale / shift folded from gamma/beta/running stats.
    """
    N, C, H, W = x_nchw.shape
    Cout = w1_oihw.shape[0]
    assert C == Cout, "downsample=None requires inplanes == planes"
    assert w2_oihw.shape == (Cout, Cout, 3, 3)
    HW = H * W

    # NCHW with H,W flattened -> (N, C, H*W): pure metadata reshape, no
    # transpose. C rides the sublanes, H*W the lanes.
    x_flat = x_nchw.reshape(N, C, HW).astype(jnp.float32)

    # OIHW -> (Cout, 9*Cin) with a tap-major (dy, dx, ci) contraction axis,
    # matching the kernel's slab row order.  Raw weights go to bf16; the BN
    # scale is kept as a separate f32 multiply inside the kernel.
    def prep_w(w_oihw):
        return (jnp.transpose(w_oihw, (0, 2, 3, 1))       # (Co, 3, 3, Ci)
                .reshape(w_oihw.shape[0], -1)             # (Co, 9*Ci)
                .astype(jnp.bfloat16))

    w1t = prep_w(w1_oihw)
    w2t = prep_w(w2_oihw)
    s1c = s1.reshape(Cout, 1).astype(jnp.float32)
    b1c = b1.reshape(Cout, 1).astype(jnp.float32)
    s2c = s2.reshape(Cout, 1).astype(jnp.float32)
    b2c = b2.reshape(Cout, 1).astype(jnp.float32)

    kernel = functools.partial(_basic_block_kernel, H, W, C, Cout)

    out_flat = pl.pallas_call(
        kernel,
        out_shape=jax.ShapeDtypeStruct((N, Cout, HW), jnp.float32),
        grid_spec=pltpu.PrefetchScalarGridSpec(
            num_scalar_prefetch=0,
            grid=(N,),
            in_specs=[
                pl.BlockSpec((1, C, HW), lambda n: (n, 0, 0)),
                pl.BlockSpec((Cout, 9 * C), lambda n: (0, 0)),
                pl.BlockSpec((Cout, 1), lambda n: (0, 0)),
                pl.BlockSpec((Cout, 1), lambda n: (0, 0)),
                pl.BlockSpec((Cout, 9 * Cout), lambda n: (0, 0)),
                pl.BlockSpec((Cout, 1), lambda n: (0, 0)),
                pl.BlockSpec((Cout, 1), lambda n: (0, 0)),
            ],
            out_specs=pl.BlockSpec((1, Cout, HW), lambda n: (n, 0, 0)),
            scratch_shapes=[
                # One bf16 flat padded buffer shared by both convs.
                pltpu.VMEM((C, HW + 2 * (W + 1)), jnp.bfloat16),
            ],
        ),
        compiler_params=pltpu.CompilerParams(
            dimension_semantics=("parallel",),   # batch over v7x's two TCs
            vmem_limit_bytes=32 * 1024 * 1024,   # tiny usage; re-derive per-gen
        ),                                       # for the real-size path.
    )(x_flat, w1t, s1c, b1c, w2t, s2c, b2c)

    return out_flat.reshape(N, Cout, H, W)


def _fold_bn(gamma, beta, mean, var, eps=1e-5):
    scale = gamma / jnp.sqrt(var + eps)
    shift = beta - mean * scale
    return scale, shift


def _reference_forward(x_nchw, w1, s1, b1, w2, s2, b2, matmul_dtype=jnp.float32):
    """Pure-JAX NCHW reference (PyTorch semantics, eval-mode BN).

    With matmul_dtype=bfloat16 it mirrors the kernel's quantization points:
    bf16 conv operands (raw weights), f32 accumulation, f32 BN/residual/ReLU.
    """
    def conv(x_, w_):
        dn = jax.lax.conv_dimension_numbers(x_.shape, w_.shape,
                                            ('NCHW', 'OIHW', 'NCHW'))
        return jax.lax.conv_general_dilated(
            x_.astype(matmul_dtype), w_.astype(matmul_dtype), (1, 1),
            ((1, 1), (1, 1)), dimension_numbers=dn,
            preferred_element_type=jnp.float32)

    out = conv(x_nchw, w1) * s1[None, :, None, None] + b1[None, :, None, None]
    out = jnp.maximum(out, 0.0)
    out = conv(out, w2) * s2[None, :, None, None] + b2[None, :, None, None]
    return jnp.maximum(out + x_nchw, 0.0)


if __name__ == "__main__":
    key = jax.random.PRNGKey(0)
    N, C, H, W = 2, 16, 16, 16      # inplanes == planes, stride=1, dilation=1
    keys = jax.random.split(key, 11)

    x = jax.random.normal(keys[0], (N, C, H, W), jnp.float32)

    # conv weights: (out, in, 3, 3), no bias (nn.Conv2d(..., bias=False))
    w1 = jax.random.normal(keys[1], (C, C, 3, 3), jnp.float32) * 0.1
    w2 = jax.random.normal(keys[2], (C, C, 3, 3), jnp.float32) * 0.1

    # BatchNorm params (eval mode: running stats)
    g1 = 1.0 + 0.1 * jax.random.normal(keys[3], (C,), jnp.float32)
    be1 = 0.1 * jax.random.normal(keys[4], (C,), jnp.float32)
    m1 = 0.1 * jax.random.normal(keys[5], (C,), jnp.float32)
    v1 = jnp.abs(jax.random.normal(keys[6], (C,), jnp.float32)) + 0.5
    g2 = 1.0 + 0.1 * jax.random.normal(keys[7], (C,), jnp.float32)
    be2 = 0.1 * jax.random.normal(keys[8], (C,), jnp.float32)
    m2 = 0.1 * jax.random.normal(keys[9], (C,), jnp.float32)
    v2 = jnp.abs(jax.random.normal(keys[10], (C,), jnp.float32)) + 0.5

    s1, b1 = _fold_bn(g1, be1, m1, v1)
    s2, b2 = _fold_bn(g2, be2, m2, v2)

    out = jax.block_until_ready(basic_block_forward(x, w1, s1, b1, w2, s2, b2))
    assert out.shape == (N, C, H, W)

    # Tight check against a reference with matched bf16 matmul operands.
    ref_bf16 = jax.block_until_ready(
        _reference_forward(x, w1, s1, b1, w2, s2, b2, matmul_dtype=jnp.bfloat16))
    assert jnp.allclose(out, ref_bf16, atol=2e-2, rtol=2e-2), \
        f"bf16-ref max abs err = {jnp.max(jnp.abs(out - ref_bf16))}"

    # Loose check against the full-f32 reference (bf16 quantization error only).
    ref_f32 = jax.block_until_ready(
        _reference_forward(x, w1, s1, b1, w2, s2, b2, matmul_dtype=jnp.float32))
    assert jnp.allclose(out, ref_f32, atol=1e-1, rtol=1e-1), \
        f"f32-ref max abs err = {jnp.max(jnp.abs(out - ref_f32))}"

    print("KERNEL_OK")
</pallas_src>

<mosaic_0001>
module attributes {stable_mosaic.version = 11 : i64} {
  func.func @_basic_block_kernel(%arg0: i32, %arg1: memref<1x16x256xf32, #tpu.memory_space<vmem>>, %arg2: memref<16x144xbf16, #tpu.memory_space<vmem>>, %arg3: memref<16x1xf32, #tpu.memory_space<vmem>>, %arg4: memref<16x1xf32, #tpu.memory_space<vmem>>, %arg5: memref<16x144xbf16, #tpu.memory_space<vmem>>, %arg6: memref<16x1xf32, #tpu.memory_space<vmem>>, %arg7: memref<16x1xf32, #tpu.memory_space<vmem>>, %arg8: memref<1x16x256xf32, #tpu.memory_space<vmem>>, %arg9: memref<16x290xbf16, #tpu.memory_space<vmem>>) attributes {dimension_semantics = [#tpu.dimension_semantics<parallel>], iteration_bounds = array<i64: 2>, scalar_prefetch = 0 : i64, scratch_operands = 1 : i64, tpu.core_type = #tpu.core_type<tc>, window_params = [{transform_indices = @transform_0, window_bounds = array<i64: 1, 16, 256>}, {pipeline_mode = #tpu.pipeline_mode<synchronous>, transform_indices = @transform_1, window_bounds = array<i64: 16, 144>}, {pipeline_mode = #tpu.pipeline_mode<synchronous>, transform_indices = @transform_2, window_bounds = array<i64: 16, 1>}, {pipeline_mode = #tpu.pipeline_mode<synchronous>, transform_indices = @transform_3, window_bounds = array<i64: 16, 1>}, {pipeline_mode = #tpu.pipeline_mode<synchronous>, transform_indices = @transform_4, window_bounds = array<i64: 16, 144>}, {pipeline_mode = #tpu.pipeline_mode<synchronous>, transform_indices = @transform_5, window_bounds = array<i64: 16, 1>}, {pipeline_mode = #tpu.pipeline_mode<synchronous>, transform_indices = @transform_6, window_bounds = array<i64: 16, 1>}, {transform_indices = @transform_7, window_bounds = array<i64: 1, 16, 256>}]} {
    %c0 = arith.constant 0 : index
    %c0_0 = arith.constant 0 : index
    %c0_1 = arith.constant 0 : index
    %0 = vector.load %arg1[%c0, %c0_0, %c0_1] : memref<1x16x256xf32, #tpu.memory_space<vmem>>, vector<1x16x256xf32>
    %1 = vector.shape_cast %0 : vector<1x16x256xf32> to vector<16x256xf32>
    %2 = tpu.iota {dimensions = array<i32: 1>} : vector<1x256xi32>
    %c16_i32 = arith.constant 16 : i32
    %c0_i32 = arith.constant 0 : i32
    %3 = arith.cmpi eq, %c16_i32, %c0_i32 : i32
    %c1_i32 = arith.constant 1 : i32
    %4 = arith.select %3, %c1_i32, %c16_i32 : i32
    %5 = vector.broadcast %4 : i32 to vector<1x256xi32>
    %6 = arith.remsi %2, %5 : vector<1x256xi32>
    %c0_i32_2 = arith.constant 0 : i32
    %7 = vector.broadcast %c0_i32_2 : i32 to vector<1x256xi32>
    %8 = arith.cmpi ne, %6, %7 : vector<1x256xi32>
    %c0_i32_3 = arith.constant 0 : i32
    %9 = vector.broadcast %c0_i32_3 : i32 to vector<1x256xi32>
    %10 = arith.cmpi slt, %6, %9 : vector<1x256xi32>
    %c0_i32_4 = arith.constant 0 : i32
    %11 = arith.cmpi slt, %4, %c0_i32_4 : i32
    %12 = vector.broadcast %11 : i1 to vector<1x256xi1>
    %13 = vector.broadcast %12 : vector<1x256xi1> to vector<1x256xi1>
    %14 = arith.xori %10, %13 : vector<1x256xi1>
    %15 = arith.andi %14, %8 : vector<1x256xi1>
    %16 = vector.broadcast %4 : i32 to vector<1x256xi32>
    %17 = arith.addi %6, %16 : vector<1x256xi32>
    %18 = arith.select %15, %17, %6 : vector<1x256xi1>, vector<1x256xi32>
    %c0_i32_5 = arith.constant 0 : i32
    %19 = vector.broadcast %c0_i32_5 : i32 to vector<1x256xi32>
    %20 = arith.cmpi sgt, %18, %19 : vector<1x256xi32>
    %c15_i32 = arith.constant 15 : i32
    %21 = vector.broadcast %c15_i32 : i32 to vector<1x256xi32>
    %22 = arith.cmpi slt, %18, %21 : vector<1x256xi32>
    %cst = arith.constant 0.000000e+00 : bf16
    %23 = vector.broadcast %cst : bf16 to vector<16x290xbf16>
    %c0_6 = arith.constant 0 : index
    %c0_7 = arith.constant 0 : index
    %24 = vector.load %arg9[%c0_6, %c0_7] : memref<16x290xbf16, #tpu.memory_space<vmem>>, vector<16x290xbf16>
    tpu.vector_store %arg9[%c0_6, %c0_7], %23 {strides = array<i32>} : memref<16x290xbf16, #tpu.memory_space<vmem>>, vector<16x290xbf16>,
    %25 = arith.truncf %1 : vector<16x256xf32> to vector<16x256xbf16>
    %c0_8 = arith.constant 0 : index
    %c17 = arith.constant 17 : index
    %26 = vector.load %arg9[%c0_8, %c17] : memref<16x290xbf16, #tpu.memory_space<vmem>>, vector<16x256xbf16>
    tpu.vector_store %arg9[%c0_8, %c17], %25 {strides = array<i32>} : memref<16x290xbf16, #tpu.memory_space<vmem>>, vector<16x256xbf16>,
    %c0_9 = arith.constant 0 : index
    %c0_10 = arith.constant 0 : index
    %27 = vector.load %arg9[%c0_9, %c0_10] : memref<16x290xbf16, #tpu.memory_space<vmem>>, vector<16x256xbf16>
    %cst_11 = arith.constant 0.000000e+00 : bf16
    %28 = vector.broadcast %cst_11 : bf16 to vector<16x256xbf16>
    %29 = vector.shape_cast %20 : vector<1x256xi1> to vector<1x256xi1>
    %30 = vector.broadcast %29 : vector<1x256xi1> to vector<16x256xi1>
    %31 = arith.select %30, %27, %28 : vector<16x256xi1>, vector<16x256xbf16>
    %c0_12 = arith.constant 0 : index
    %c1 = arith.constant 1 : index
    %32 = vector.load %arg9[%c0_12, %c1] : memref<16x290xbf16, #tpu.memory_space<vmem>>, vector<16x256xbf16>
    %c0_13 = arith.constant 0 : index
    %c2 = arith.constant 2 : index
    %33 = vector.load %arg9[%c0_13, %c2] : memref<16x290xbf16, #tpu.memory_space<vmem>>, vector<16x256xbf16>
    %cst_14 = arith.constant 0.000000e+00 : bf16
    %34 = vector.broadcast %cst_14 : bf16 to vector<16x256xbf16>
    %35 = vector.shape_cast %22 : vector<1x256xi1> to vector<1x256xi1>
    %36 = vector.broadcast %35 : vector<1x256xi1> to vector<16x256xi1>
    %37 = arith.select %36, %33, %34 : vector<16x256xi1>, vector<16x256xbf16>
    %c0_15 = arith.constant 0 : index
    %c16 = arith.constant 16 : index
    %38 = vector.load %arg9[%c0_15, %c16] : memref<16x290xbf16, #tpu.memory_space<vmem>>, vector<16x256xbf16>
    %cst_16 = arith.constant 0.000000e+00 : bf16
    %39 = vector.broadcast %cst_16 : bf16 to vector<16x256xbf16>
    %40 = vector.shape_cast %20 : vector<1x256xi1> to vector<1x256xi1>
    %41 = vector.broadcast %40 : vector<1x256xi1> to vector<16x256xi1>
    %42 = arith.select %41, %38, %39 : vector<16x256xi1>, vector<16x256xbf16>
    %c0_17 = arith.constant 0 : index
    %c17_18 = arith.constant 17 : index
    %43 = vector.load %arg9[%c0_17, %c17_18] : memref<16x290xbf16, #tpu.memory_space<vmem>>, vector<16x256xbf16>
    %c0_19 = arith.constant 0 : index
    %c18 = arith.constant 18 : index
    %44 = vector.load %arg9[%c0_19, %c18] : memref<16x290xbf16, #tpu.memory_space<vmem>>, vector<16x256xbf16>
    %cst_20 = arith.constant 0.000000e+00 : bf16
    %45 = vector.broadcast %cst_20 : bf16 to vector<16x256xbf16>
    %46 = vector.shape_cast %22 : vector<1x256xi1> to vector<1x256xi1>
    %47 = vector.broadcast %46 : vector<1x256xi1> to vector<16x256xi1>
    %48 = arith.select %47, %44, %45 : vector<16x256xi1>, vector<16x256xbf16>
    %c0_21 = arith.constant 0 : index
    %c32 = arith.constant 32 : index
    %49 = vector.load %arg9[%c0_21, %c32] : memref<16x290xbf16, #tpu.memory_space<vmem>>, vector<16x256xbf16>
    %cst_22 = arith.constant 0.000000e+00 : bf16
    %50 = vector.broadcast %cst_22 : bf16 to vector<16x256xbf16>
    %51 = vector.shape_cast %20 : vector<1x256xi1> to vector<1x256xi1>
    %52 = vector.broadcast %51 : vector<1x256xi1> to vector<16x256xi1>
    %53 = arith.select %52, %49, %50 : vector<16x256xi1>, vector<16x256xbf16>
    %c0_23 = arith.constant 0 : index
    %c33 = arith.constant 33 : index
    %54 = vector.load %arg9[%c0_23, %c33] : memref<16x290xbf16, #tpu.memory_space<vmem>>, vector<16x256xbf16>
    %c0_24 = arith.constant 0 : index
    %c34 = arith.constant 34 : index
    %55 = vector.load %arg9[%c0_24, %c34] : memref<16x290xbf16, #tpu.memory_space<vmem>>, vector<16x256xbf16>
    %cst_25 = arith.constant 0.000000e+00 : bf16
    %56 = vector.broadcast %cst_25 : bf16 to vector<16x256xbf16>
    %57 = vector.shape_cast %22 : vector<1x256xi1> to vector<1x256xi1>
    %58 = vector.broadcast %57 : vector<1x256xi1> to vector<16x256xi1>
    %59 = arith.select %58, %55, %56 : vector<16x256xi1>, vector<16x256xbf16>
    %60 = tpu.concatenate %31, %32, %37, %42, %43, %48, %53, %54, %59 in 0 : vector<16x256xbf16>, vector<16x256xbf16>, vector<16x256xbf16>, vector<16x256xbf16>, vector<16x256xbf16>, vector<16x256xbf16>, vector<16x256xbf16>, vector<16x256xbf16>, vector<16x256xbf16> -> vector<144x256xbf16>
    %c0_26 = arith.constant 0 : index
    %c0_27 = arith.constant 0 : index
    %61 = vector.load %arg2[%c0_26, %c0_27] : memref<16x144xbf16, #tpu.memory_space<vmem>>, vector<16x144xbf16>
    %cst_28 = arith.constant dense<0.000000e+00> : vector<16x256xf32>
    %62 = tpu.matmul %61, %60, %cst_28 {dimension_numbers = #tpu.dot_dimension_numbers<[1], [0], [0], [1], [0, 0, 1, 1], [], []>} : vector<16x144xbf16>, vector<144x256xbf16>, vector<16x256xf32> -> vector<16x256xf32>
    %c0_29 = arith.constant 0 : index
    %c0_30 = arith.constant 0 : index
    %63 = vector.load %arg3[%c0_29, %c0_30] : memref<16x1xf32, #tpu.memory_space<vmem>>, vector<16x1xf32>
    %64 = vector.broadcast %63 : vector<16x1xf32> to vector<16x256xf32>
    %65 = arith.mulf %62, %64 : vector<16x256xf32>
    %c0_31 = arith.constant 0 : index
    %c0_32 = arith.constant 0 : index
    %66 = vector.load %arg4[%c0_31, %c0_32] : memref<16x1xf32, #tpu.memory_space<vmem>>, vector<16x1xf32>
    %67 = vector.broadcast %66 : vector<16x1xf32> to vector<16x256xf32>
    %68 = arith.addf %65, %67 : vector<16x256xf32>
    %cst_33 = arith.constant 0.000000e+00 : f32
    %69 = vector.broadcast %cst_33 : f32 to vector<16x256xf32>
    %70 = arith.maximumf %68, %69 : vector<16x256xf32>
    %71 = arith.truncf %70 : vector<16x256xf32> to vector<16x256xbf16>
    %c0_34 = arith.constant 0 : index
    %c17_35 = arith.constant 17 : index
    %72 = vector.load %arg9[%c0_34, %c17_35] : memref<16x290xbf16, #tpu.memory_space<vmem>>, vector<16x256xbf16>
    tpu.vector_store %arg9[%c0_34, %c17_35], %71 {strides = array<i32>} : memref<16x290xbf16, #tpu.memory_space<vmem>>, vector<16x256xbf16>,
    %c0_36 = arith.constant 0 : index
    %c0_37 = arith.constant 0 : index
    %73 = vector.load %arg9[%c0_36, %c0_37] : memref<16x290xbf16, #tpu.memory_space<vmem>>, vector<16x256xbf16>
    %cst_38 = arith.constant 0.000000e+00 : bf16
    %74 = vector.broadcast %cst_38 : bf16 to vector<16x256xbf16>
    %75 = vector.shape_cast %20 : vector<1x256xi1> to vector<1x256xi1>
    %76 = vector.broadcast %75 : vector<1x256xi1> to vector<16x256xi1>
    %77 = arith.select %76, %73, %74 : vector<16x256xi1>, vector<16x256xbf16>
    %c0_39 = arith.constant 0 : index
    %c1_40 = arith.constant 1 : index
    %78 = vector.load %arg9[%c0_39, %c1_40] : memref<16x290xbf16, #tpu.memory_space<vmem>>, vector<16x256xbf16>
    %c0_41 = arith.constant 0 : index
    %c2_42 = arith.constant 2 : index
    %79 = vector.load %arg9[%c0_41, %c2_42] : memref<16x290xbf16, #tpu.memory_space<vmem>>, vector<16x256xbf16>
    %cst_43 = arith.constant 0.000000e+00 : bf16
    %80 = vector.broadcast %cst_43 : bf16 to vector<16x256xbf16>
    %81 = vector.shape_cast %22 : vector<1x256xi1> to vector<1x256xi1>
    %82 = vector.broadcast %81 : vector<1x256xi1> to vector<16x256xi1>
    %83 = arith.select %82, %79, %80 : vector<16x256xi1>, vector<16x256xbf16>
    %c0_44 = arith.constant 0 : index
    %c16_45 = arith.constant 16 : index
    %84 = vector.load %arg9[%c0_44, %c16_45] : memref<16x290xbf16, #tpu.memory_space<vmem>>, vector<16x256xbf16>
    %cst_46 = arith.constant 0.000000e+00 : bf16
    %85 = vector.broadcast %cst_46 : bf16 to vector<16x256xbf16>
    %86 = vector.shape_cast %20 : vector<1x256xi1> to vector<1x256xi1>
    %87 = vector.broadcast %86 : vector<1x256xi1> to vector<16x256xi1>
    %88 = arith.select %87, %84, %85 : vector<16x256xi1>, vector<16x256xbf16>
    %c0_47 = arith.constant 0 : index
    %c17_48 = arith.constant 17 : index
    %89 = vector.load %arg9[%c0_47, %c17_48] : memref<16x290xbf16, #tpu.memory_space<vmem>>, vector<16x256xbf16>
    %c0_49 = arith.constant 0 : index
    %c18_50 = arith.constant 18 : index
    %90 = vector.load %arg9[%c0_49, %c18_50] : memref<16x290xbf16, #tpu.memory_space<vmem>>, vector<16x256xbf16>
    %cst_51 = arith.constant 0.000000e+00 : bf16
    %91 = vector.broadcast %cst_51 : bf16 to vector<16x256xbf16>
    %92 = vector.shape_cast %22 : vector<1x256xi1> to vector<1x256xi1>
    %93 = vector.broadcast %92 : vector<1x256xi1> to vector<16x256xi1>
    %94 = arith.select %93, %90, %91 : vector<16x256xi1>, vector<16x256xbf16>
    %c0_52 = arith.constant 0 : index
    %c32_53 = arith.constant 32 : index
    %95 = vector.load %arg9[%c0_52, %c32_53] : memref<16x290xbf16, #tpu.memory_space<vmem>>, vector<16x256xbf16>
    %cst_54 = arith.constant 0.000000e+00 : bf16
    %96 = vector.broadcast %cst_54 : bf16 to vector<16x256xbf16>
    %97 = vector.shape_cast %20 : vector<1x256xi1> to vector<1x256xi1>
    %98 = vector.broadcast %97 : vector<1x256xi1> to vector<16x256xi1>
    %99 = arith.select %98, %95, %96 : vector<16x256xi1>, vector<16x256xbf16>
    %c0_55 = arith.constant 0 : index
    %c33_56 = arith.constant 33 : index
    %100 = vector.load %arg9[%c0_55, %c33_56] : memref<16x290xbf16, #tpu.memory_space<vmem>>, vector<16x256xbf16>
    %c0_57 = arith.constant 0 : index
    %c34_58 = arith.constant 34 : index
    %101 = vector.load %arg9[%c0_57, %c34_58] : memref<16x290xbf16, #tpu.memory_space<vmem>>, vector<16x256xbf16>
    %cst_59 = arith.constant 0.000000e+00 : bf16
    %102 = vector.broadcast %cst_59 : bf16 to vector<16x256xbf16>
    %103 = vector.shape_cast %22 : vector<1x256xi1> to vector<1x256xi1>
    %104 = vector.broadcast %103 : vector<1x256xi1> to vector<16x256xi1>
    %105 = arith.select %104, %101, %102 : vector<16x256xi1>, vector<16x256xbf16>
    %106 = tpu.concatenate %77, %78, %83, %88, %89, %94, %99, %100, %105 in 0 : vector<16x256xbf16>, vector<16x256xbf16>, vector<16x256xbf16>, vector<16x256xbf16>, vector<16x256xbf16>, vector<16x256xbf16>, vector<16x256xbf16>, vector<16x256xbf16>, vector<16x256xbf16> -> vector<144x256xbf16>
    %c0_60 = arith.constant 0 : index
    %c0_61 = arith.constant 0 : index
    %107 = vector.load %arg5[%c0_60, %c0_61] : memref<16x144xbf16, #tpu.memory_space<vmem>>, vector<16x144xbf16>
    %cst_62 = arith.constant dense<0.000000e+00> : vector<16x256xf32>
    %108 = tpu.matmul %107, %106, %cst_62 {dimension_numbers = #tpu.dot_dimension_numbers<[1], [0], [0], [1], [0, 0, 1, 1], [], []>} : vector<16x144xbf16>, vector<144x256xbf16>, vector<16x256xf32> -> vector<16x256xf32>
    %c0_63 = arith.constant 0 : index
    %c0_64 = arith.constant 0 : index
    %109 = vector.load %arg6[%c0_63, %c0_64] : memref<16x1xf32, #tpu.memory_space<vmem>>, vector<16x1xf32>
    %110 = vector.broadcast %109 : vector<16x1xf32> to vector<16x256xf32>
    %111 = arith.mulf %108, %110 : vector<16x256xf32>
    %c0_65 = arith.constant 0 : index
    %c0_66 = arith.constant 0 : index
    %112 = vector.load %arg7[%c0_65, %c0_66] : memref<16x1xf32, #tpu.memory_space<vmem>>, vector<16x1xf32>
    %113 = vector.broadcast %112 : vector<16x1xf32> to vector<16x256xf32>
    %114 = arith.addf %111, %113 : vector<16x256xf32>
    %115 = arith.addf %114, %1 : vector<16x256xf32>
    %cst_67 = arith.constant 0.000000e+00 : f32
    %116 = vector.broadcast %cst_67 : f32 to vector<16x256xf32>
    %117 = arith.maximumf %115, %116 : vector<16x256xf32>
    %c0_68 = arith.constant 0 : index
    %c0_69 = arith.constant 0 : index
    %c0_70 = arith.constant 0 : index
    %118 = vector.load %arg8[%c0_68, %c0_69, %c0_70] : memref<1x16x256xf32, #tpu.memory_space<vmem>>, vector<1x16x256xf32>
    %119 = vector.shape_cast %118 : vector<1x16x256xf32> to vector<16x256xf32>
    %120 = vector.shape_cast %117 : vector<16x256xf32> to vector<1x16x256xf32>
    tpu.vector_store %arg8[%c0_68, %c0_69, %c0_70], %120 {strides = array<i32>} : memref<1x16x256xf32, #tpu.memory_space<vmem>>, vector<1x16x256xf32>,
    return
  }
  func.func @transform_0(%arg0: i32) -> (i32, i32, i32) {
    %c0_i32 = arith.constant 0 : i32
    %c0_i32_0 = arith.constant 0 : i32
    %c0_i32_1 = arith.constant 0 : i32
    return %arg0, %c0_i32, %c0_i32_0 : i32, i32, i32
  }
  func.func @transform_1(%arg0: i32) -> (i32, i32) {
    %c0_i32 = arith.constant 0 : i32
    %c0_i32_0 = arith.constant 0 : i32
    %c0_i32_1 = arith.constant 0 : i32
    return %c0_i32, %c0_i32_0 : i32, i32
  }
  func.func @transform_2(%arg0: i32) -> (i32, i32) {
    %c0_i32 = arith.constant 0 : i32
    %c0_i32_0 = arith.constant 0 : i32
    %c0_i32_1 = arith.constant 0 : i32
    return %c0_i32, %c0_i32_0 : i32, i32
  }
  func.func @transform_3(%arg0: i32) -> (i32, i32) {
    %c0_i32 = arith.constant 0 : i32
    %c0_i32_0 = arith.constant 0 : i32
    %c0_i32_1 = arith.constant 0 : i32
    return %c0_i32, %c0_i32_0 : i32, i32
  }
  func.func @transform_4(%arg0: i32) -> (i32, i32) {
    %c0_i32 = arith.constant 0 : i32
    %c0_i32_0 = arith.constant 0 : i32
    %c0_i32_1 = arith.constant 0 : i32
    return %c0_i32, %c0_i32_0 : i32, i32
  }
  func.func @transform_5(%arg0: i32) -> (i32, i32) {
    %c0_i32 = arith.constant 0 : i32
    %c0_i32_0 = arith.constant 0 : i32
    %c0_i32_1 = arith.constant 0 : i32
    return %c0_i32, %c0_i32_0 : i32, i32
  }
  func.func @transform_6(%arg0: i32) -> (i32, i32) {
    %c0_i32 = arith.constant 0 : i32
    %c0_i32_0 = arith.constant 0 : i32
    %c0_i32_1 = arith.constant 0 : i32
    return %c0_i32, %c0_i32_0 : i32, i32
  }
  func.func @transform_7(%arg0: i32) -> (i32, i32, i32) {
    %c0_i32 = arith.constant 0 : i32
    %c0_i32_0 = arith.constant 0 : i32
    %c0_i32_1 = arith.constant 0 : i32
    return %arg0, %c0_i32, %c0_i32_0 : i32, i32, i32
  }
}

</mosaic_0001>

<llo_original>
// kernel: tpu_custom_call.1
$region0: #{tpu_custom_call.1}
  #allocation0 [shape = 'u32[]', space=smem, size = 0x4, offset = 0x4, fixed_abs, tag = 'smem constant byte address 0x4 - core index']
  #allocation1 [shape = 'u32[144,128]{1,0:T(1,128)}', space=vmem, size = 0x12000, scoped, tag = 'internal scratch']
  #allocation2 [shape = 'bf16[16,290]{1,0:T(8,128)(2,1)}', space=vmem, size = 0x3000, scoped, tag = 'scratch operand']
  %s0 = inlined_call_operand.vmem [shape: f32[2,16,256], index: 0, kind: input, shape index: {}]
  %s1 = inlined_call_operand.hbm [shape: bf16[16,144], index: 1, kind: input, shape index: {}]
  %s2 = inlined_call_operand.vmem [shape: f32[16,1], index: 2, kind: input, shape index: {}]
  %s3 = inlined_call_operand.vmem [shape: f32[16,1], index: 3, kind: input, shape index: {}]
  %s4 = inlined_call_operand.hbm [shape: bf16[16,144], index: 4, kind: input, shape index: {}]
  %s5 = inlined_call_operand.vmem [shape: f32[16,1], index: 5, kind: input, shape index: {}]
  %s6 = inlined_call_operand.vmem [shape: f32[16,1], index: 6, kind: input, shape index: {}]
  %s7 = inlined_call_operand.hbm [shape: f32[2,16,256], index: 7, kind: output, shape index: {}]
  %s8 = sld [smem:[#allocation0]]
  $region69: #{tpu_custom_call.1} parent=0
    _
  %s10 = ssub.s32 1, %s8
  %s11 = scalar_select 0, %s10, %s8
  $region1: #{tpu_custom_call.1} parent=0
    #allocation3 [shape = 'u8[8192]{0}', space=vmem, size = 0x2000, scoped, tag = 'input window, operand 1, single buffered']
    #allocation4 [shape = 's32[2]{0}', space=sflag, size = 0x8, scoped, tag = 'scoped memory for tpu_custom_call.1']
    #allocation5 [shape = 's32[2]{0}', space=sflag, size = 0x8, scoped, tag = 'scoped memory for tpu_custom_call.1']
    #allocation6 [shape = 'u8[8192]{0}', space=vmem, size = 0x2000, scoped, tag = 'input window, operand 4, single buffered']
    #allocation7 [shape = 's32[1]{0}', space=sflag, size = 0x4, scoped, tag = 'scoped memory for tpu_custom_call.1']
    #allocation8 [shape = 'u8[32768]{0}', space=vmem, size = 0x8000, scoped, tag = 'output window, operand 0']
    %12 = vsyncpa [#allocation4], 0
    %13 = vsyncpa [#allocation7], 0
    %14 = vsyncpa [#allocation5], 0
    %s15 = scalar_lea.sflag [#allocation5], 1
    %16 = vsyncpa %s15, 0
    loop: start=0, step=1, limit=4
    $region2: #{tpu_custom_call.1} parent=1 // loop_pre_header
      _
    $region3: #{tpu_custom_call.1} parent=1 // loop_header
      %s18 = sphi 0, %s22
      %p19 = scmp.ge.s32.totalorder %s18, 4
      %s28 = sphi 0, %s30
      %s31 = sphi 0, %s28
      %s32 = sphi 0, %s31
      %s48 = sphi 0, %s32
      %s52 = sphi 0, %s52
      %s54 = sphi 0, %s52
      %s55 = sphi 0, %s54
      %s69 = sphi 0, %s55
      %s73 = sphi 0, %s73
      %s75 = sphi 0, %s73
      %s76 = sphi 0, %s75
      %s90 = sphi 0, %s76
      %s94 = sphi 0, %s94
      %s96 = sphi 0, %s94
      %s97 = sphi 0, %s96
      %s111 = sphi 0, %s97
      %s115 = sphi 0, %s115
      %s117 = sphi 0, %s115
      %s118 = sphi 0, %s117
      %s132 = sphi 0, %s118
      %s136 = sphi 0, %s136
      %s138 = sphi 0, %s136
      %s139 = sphi 0, %s138
      %s153 = sphi 0, %s139
      %s157 = sphi 0, %s157
      %s159 = sphi 0, %s157
      %s160 = sphi 0, %s159
      %s174 = sphi 0, %s160
      %s180 = sphi 0, %s182
      %s183 = sphi 0, %s180
      %s184 = sphi 0, %s183
      %s200 = sphi 0, %s184
    $region4: #{tpu_custom_call.1} parent=1 // loop_header_branch
      %21 = sbr.rel (%p19) target = $region8
    $region5: #{tpu_custom_call.1} parent=1 // loop_body
      %s23 = ssub.s32 %s18, 1
      %s24 = ssub.s32 %s18, 2
      %s25 = sadd.s32 %s18, 1
      %s26 = ssub.s32 %s18, %s25
      %p27 = scmp.eq.s32.totalorder %s26, 0
      %s29 = sadd.s32 %s28, 1
      %s30 = scalar_select %p27, %s28, %s29
      %p33 = pneg %p27
      %p34 = scmp.eq.s32.totalorder %s18, 1
      %p35 = por %p33, %p34
      %p36 = scmp.ne.s32.totalorder %s28, %s31
      %p37 = scmp.eq.s32.totalorder %s18, 0
      %p38 = por %p36, %p37
      %p39 = scmp.ne.s32.totalorder %s28, %s31
      %p40 = scmp.eq.s32.totalorder %s23, 1
      %p41 = por %p39, %p40
      %p42 = scmp.ne.s32.totalorder %s31, %s32
      %p43 = scmp.eq.s32.totalorder %s23, 0
      %p44 = por %p42, %p43
      %p45 = scmp.ne.s32.totalorder %s31, %s32
      %p46 = scmp.eq.s32.totalorder %s24, 1
      %p47 = por %p45, %p46
      %p49 = scmp.ne.s32.totalorder %s32, %s48
      %p50 = scmp.eq.s32.totalorder %s24, 0
      %p51 = por %p49, %p50
      %s53 = sadd.s32 %s52, 1
      %p56 = scmp.eq.s32.totalorder %s18, 1
      %p57 = scmp.ne.s32.totalorder %s52, %s54
      %p58 = scmp.eq.s32.totalorder %s18, 0
      %p59 = por %p57, %p58
      %p60 = scmp.ne.s32.totalorder %s52, %s54
      %p61 = scmp.eq.s32.totalorder %s23, 1
      %p62 = por %p60, %p61
      %p63 = scmp.ne.s32.totalorder %s54, %s55
      %p64 = scmp.eq.s32.totalorder %s23, 0
      %p65 = por %p63, %p64
      %p66 = scmp.ne.s32.totalorder %s54, %s55
      %p67 = scmp.eq.s32.totalorder %s24, 1
      %p68 = por %p66, %p67
      %p70 = scmp.ne.s32.totalorder %s55, %s69
      %p71 = scmp.eq.s32.totalorder %s24, 0
      %p72 = por %p70, %p71
      %s74 = sadd.s32 %s73, 1
      %p77 = scmp.eq.s32.totalorder %s18, 1
      %p78 = scmp.ne.s32.totalorder %s73, %s75
      %p79 = scmp.eq.s32.totalorder %s18, 0
      %p80 = por %p78, %p79
      %p81 = scmp.ne.s32.totalorder %s73, %s75
      %p82 = scmp.eq.s32.totalorder %s23, 1
      %p83 = por %p81, %p82
      %p84 = scmp.ne.s32.totalorder %s75, %s76
      %p85 = scmp.eq.s32.totalorder %s23, 0
      %p86 = por %p84, %p85
      %p87 = scmp.ne.s32.totalorder %s75, %s76
      %p88 = scmp.eq.s32.totalorder %s24, 1
      %p89 = por %p87, %p88
      %p91 = scmp.ne.s32.totalorder %s76, %s90
      %p92 = scmp.eq.s32.totalorder %s24, 0
      %p93 = por %p91, %p92
      %s95 = sadd.s32 %s94, 1
      %p98 = scmp.eq.s32.totalorder %s18, 1
      %p99 = scmp.ne.s32.totalorder %s94, %s96
      %p100 = scmp.eq.s32.totalorder %s18, 0
      %p101 = por %p99, %p100
      %p102 = scmp.ne.s32.totalorder %s94, %s96
      %p103 = scmp.eq.s32.totalorder %s23, 1
      %p104 = por %p102, %p103
      %p105 = scmp.ne.s32.totalorder %s96, %s97
      %p106 = scmp.eq.s32.totalorder %s23, 0
      %p107 = por %p105, %p106
      %p108 = scmp.ne.s32.totalorder %s96, %s97
      %p109 = scmp.eq.s32.totalorder %s24, 1
      %p110 = por %p108, %p109
      %p112 = scmp.ne.s32.totalorder %s97, %s111
      %p113 = scmp.eq.s32.totalorder %s24, 0
      %p114 = por %p112, %p113
      %s116 = sadd.s32 %s115, 1
      %p119 = scmp.eq.s32.totalorder %s18, 1
      %p120 = scmp.ne.s32.totalorder %s115, %s117
      %p121 = scmp.eq.s32.totalorder %s18, 0
      %p122 = por %p120, %p121
      %p123 = scmp.ne.s32.totalorder %s115, %s117
      %p124 = scmp.eq.s32.totalorder %s23, 1
      %p125 = por %p123, %p124
      %p126 = scmp.ne.s32.totalorder %s117, %s118
      %p127 = scmp.eq.s32.totalorder %s23, 0
      %p128 = por %p126, %p127
      %p129 = scmp.ne.s32.totalorder %s117, %s118
      %p130 = scmp.eq.s32.totalorder %s24, 1
      %p131 = por %p129, %p130
      %p133 = scmp.ne.s32.totalorder %s118, %s132
      %p134 = scmp.eq.s32.totalorder %s24, 0
      %p135 = por %p133, %p134
      %s137 = sadd.s32 %s136, 1
      %p140 = scmp.eq.s32.totalorder %s18, 1
      %p141 = scmp.ne.s32.totalorder %s136, %s138
      %p142 = scmp.eq.s32.totalorder %s18, 0
      %p143 = por %p141, %p142
      %p144 = scmp.ne.s32.totalorder %s136, %s138
      %p145 = scmp.eq.s32.totalorder %s23, 1
      %p146 = por %p144, %p145
      %p147 = scmp.ne.s32.totalorder %s138, %s139
      %p148 = scmp.eq.s32.totalorder %s23, 0
      %p149 = por %p147, %p148
      %p150 = scmp.ne.s32.totalorder %s138, %s139
      %p151 = scmp.eq.s32.totalorder %s24, 1
      %p152 = por %p150, %p151
      %p154 = scmp.ne.s32.totalorder %s139, %s153
      %p155 = scmp.eq.s32.totalorder %s24, 0
      %p156 = por %p154, %p155
      %s158 = sadd.s32 %s157, 1
      %p161 = scmp.eq.s32.totalorder %s18, 1
      %p162 = scmp.ne.s32.totalorder %s157, %s159
      %p163 = scmp.eq.s32.totalorder %s18, 0
      %p164 = por %p162, %p163
      %p165 = scmp.ne.s32.totalorder %s157, %s159
      %p166 = scmp.eq.s32.totalorder %s23, 1
      %p167 = por %p165, %p166
      %p168 = scmp.ne.s32.totalorder %s159, %s160
      %p169 = scmp.eq.s32.totalorder %s23, 0
      %p170 = por %p168, %p169
      %p171 = scmp.ne.s32.totalorder %s159, %s160
      %p172 = scmp.eq.s32.totalorder %s24, 1
      %p173 = por %p171, %p172
      %p175 = scmp.ne.s32.totalorder %s160, %s174
      %p176 = scmp.eq.s32.totalorder %s24, 0
      %p177 = por %p175, %p176
      %s178 = ssub.s32 %s18, %s25
      %p179 = scmp.eq.s32.totalorder %s178, 0
      %s181 = sadd.s32 %s180, 1
      %s182 = scalar_select %p179, %s180, %s181
      %p185 = pneg %p179
      %p186 = scmp.eq.s32.totalorder %s18, 1
      %p187 = por %p185, %p186
      %p188 = scmp.ne.s32.totalorder %s180, %s183
      %p189 = scmp.eq.s32.totalorder %s18, 0
      %p190 = por %p188, %p189
      %p191 = scmp.ne.s32.totalorder %s180, %s183
      %p192 = scmp.eq.s32.totalorder %s23, 1
      %p193 = por %p191, %p192
      %p194 = scmp.ne.s32.totalorder %s183, %s184
      %p195 = scmp.eq.s32.totalorder %s23, 0
      %p196 = por %p194, %p195
      %p197 = scmp.ne.s32.totalorder %s183, %s184
      %p198 = scmp.eq.s32.totalorder %s24, 1
      %p199 = por %p197, %p198
      %p201 = scmp.ne.s32.totalorder %s184, %s200
      %p202 = scmp.eq.s32.totalorder %s24, 0
      %p203 = por %p201, %p202
      %p204 = scmp.le.s32.totalorder 1, %s18
      %p205 = scmp.lt.s32.totalorder %s18, 3
      %p206 = pnand %p204, %p205
      %p207 = pneg %p206
      // Predicated region
      $region9: #{tpu_custom_call.1} parent=5 // pred_check
        _
      $region10: #{tpu_custom_call.1} parent=5 // pred_check_branch
        %209 = sbr.rel (%p206) target = $region12
      $region11: #{tpu_custom_call.1} parent=5 // pred_region
        %s210 = ssub.s32 %s18, 1
        // Predicated region
        $region13: #{tpu_custom_call.1} parent=11 // pred_check
          %p211 = pneg %p65
        $region14: #{tpu_custom_call.1} parent=11 // pred_check_branch
          %213 = sbr.rel (%p211) target = $region16
        $region15: #{tpu_custom_call.1} parent=11 // pred_region
          %s215 = ssub.s32 256, 256
          %216 = vsyncadd [#allocation4], %s215
          %s217 = sshll.u32 [#allocation3], 4
          %s218 = int_to_ptr.vmem [resolvable:$true] %s217
          %223 = dma.hbm_to_vmem [thread:$0]  %s1, 256, %s218, [#allocation4], 128, 128, 8
        $region16: #{tpu_custom_call.1} parent=11 // pred_fallthru
          _
        // Predicated region
        $region17: #{tpu_custom_call.1} parent=11 // pred_check
          %p224 = pneg %p86
        $region18: #{tpu_custom_call.1} parent=11 // pred_check_branch
          %226 = sbr.rel (%p224) target = $region20
        $region19: #{tpu_custom_call.1} parent=11 // pred_region
          _
        $region20: #{tpu_custom_call.1} parent=11 // pred_fallthru
          _
        // Predicated region
        $region21: #{tpu_custom_call.1} parent=11 // pred_check
          %p227 = pneg %p107
        $region22: #{tpu_custom_call.1} parent=11 // pred_check_branch
          %229 = sbr.rel (%p227) target = $region24
        $region23: #{tpu_custom_call.1} parent=11 // pred_region
          _
        $region24: #{tpu_custom_call.1} parent=11 // pred_fallthru
          _
        // Predicated region
        $region25: #{tpu_custom_call.1} parent=11 // pred_check
          %p230 = pneg %p128
        $region26: #{tpu_custom_call.1} parent=11 // pred_check_branch
          %232 = sbr.rel (%p230) target = $region28
        $region27: #{tpu_custom_call.1} parent=11 // pred_region
          %s234 = ssub.s32 256, 256
          %235 = vsyncadd [#allocation7], %s234
          %s236 = sshll.u32 [#allocation6], 4
          %s237 = int_to_ptr.vmem [resolvable:$true] %s236
          %242 = dma.hbm_to_vmem [thread:$0]  %s4, 256, %s237, [#allocation7], 128, 128, 8
        $region28: #{tpu_custom_call.1} parent=11 // pred_fallthru
          _
        // Predicated region
        $region29: #{tpu_custom_call.1} parent=11 // pred_check
          %p243 = pneg %p149
        $region30: #{tpu_custom_call.1} parent=11 // pred_check_branch
          %245 = sbr.rel (%p243) target = $region32
        $region31: #{tpu_custom_call.1} parent=11 // pred_region
          _
        $region32: #{tpu_custom_call.1} parent=11 // pred_fallthru
          _
        // Predicated region
        $region33: #{tpu_custom_call.1} parent=11 // pred_check
          %p246 = pneg %p170
        $region34: #{tpu_custom_call.1} parent=11 // pred_check_branch
          %248 = sbr.rel (%p246) target = $region36
        $region35: #{tpu_custom_call.1} parent=11 // pred_region
          _
        $region36: #{tpu_custom_call.1} parent=11 // pred_fallthru
          _
      $region12: #{tpu_custom_call.1} parent=5 // pred_fallthru
        _
      %p249 = scmp.lt.s32.totalorder %s18, 2
      // Predicated region
      $region37: #{tpu_custom_call.1} parent=5 // pred_check
        %p250 = pneg %p249
      $region38: #{tpu_custom_call.1} parent=5 // pred_check_branch
        %252 = sbr.rel (%p250) target = $region40
      $region39: #{tpu_custom_call.1} parent=5 // pred_region
        // Predicated region
        $region41: #{tpu_custom_call.1} parent=39 // pred_check
          %p253 = pneg %p38
        $region42: #{tpu_custom_call.1} parent=39 // pred_check_branch
          %255 = sbr.rel (%p253) target = $region44
        $region43: #{tpu_custom_call.1} parent=39 // pred_region
          %p256 = scmp.lt.s32.totalorder %s18, 1
          %s257 = scalar_select %p256, %s18, 1
          %s258 = smul.addr %s257, 4
          %s259 = smul.addr %s258, 8
          %s260 = scalar_lea.vmem %s0, %s259
        $region44: #{tpu_custom_call.1} parent=39 // pred_fallthru
          _
      $region40: #{tpu_custom_call.1} parent=5 // pred_fallthru
        _
      %p261 = scmp.le.s32.totalorder 1, %s18
      %p262 = scmp.lt.s32.totalorder %s18, 3
      %p263 = pnand %p261, %p262
      %p264 = pneg %p263
      // Predicated region
      $region45: #{tpu_custom_call.1} parent=5 // pred_check
        _
      $region46: #{tpu_custom_call.1} parent=5 // pred_check_branch
        %266 = sbr.rel (%p263) target = $region48
      $region47: #{tpu_custom_call.1} parent=5 // pred_region
        %s267 = ssub.s32 %s18, 1
        // Predicated region
        $region49: #{tpu_custom_call.1} parent=47 // pred_check
          %p268 = pneg %p65
        $region50: #{tpu_custom_call.1} parent=47 // pred_check_branch
          %270 = sbr.rel (%p268) target = $region52
        $region51: #{tpu_custom_call.1} parent=47 // pred_region
          %271 = dma.done [#allocation4], 256
        $region52: #{tpu_custom_call.1} parent=47 // pred_fallthru
          _
        // Predicated region
        $region53: #{tpu_custom_call.1} parent=47 // pred_check
          %p272 = pneg %p128
        $region54: #{tpu_custom_call.1} parent=47 // pred_check_branch
          %274 = sbr.rel (%p272) target = $region56
        $region55: #{tpu_custom_call.1} parent=47 // pred_region
          %275 = dma.done [#allocation7], 256
        $region56: #{tpu_custom_call.1} parent=47 // pred_fallthru
          _
        %p276 = scmp.lt.s32.totalorder %s23, 1
        %s277 = scalar_select %p276, %s23, 1
        %s278 = smul.addr %s277, 4
        %s279 = smul.addr %s278, 8
        %s280 = scalar_lea.vmem %s0, %s279
        %p281 = pneg %p44
        %p282 = pneg %p41
        %p283 = pneg %p65
        %p284 = pneg %p62
        %p285 = pneg %p86
        %p286 = pneg %p83
        %p287 = pneg %p107
        %p288 = pneg %p104
        %p289 = pneg %p128
        %p290 = pneg %p125
        %p291 = pneg %p149
        %p292 = pneg %p146
        %p293 = pneg %p170
        %p294 = pneg %p167
        %p295 = pneg %p196
        %p296 = pneg %p193
        %s297 = sand.u32 %s183, 1
        %s298 = scalar_lea.sflag [#allocation5], %s297
        %s299 = sand.u32 %s183, 1
        %s300 = smul.addr %s299, 32
        %s301 = scalar_lea.vmem [#allocation8], %s300
        %p302 = scmp.lt.s32.totalorder %s23, 1
        %s303 = scalar_select %p302, %s23, 1
        %s304 = smul.addr %s303, 4
        %s305 = smul.addr %s304, 8
        %s306 = scalar_lea.vmem %s0, %s305
        %v310 = vld [vmem:[%s306] sm:$0xff]
        %v311 = vld [vmem:[%s306 + $0x8] sm:$0xff]
        %v312 = vld [vmem:[%s306 + $0x10] sm:$0xff]
        %v313 = vld [vmem:[%s306 + $0x18] sm:$0xff]
        %v314 = vlaneseq
        %v315 = vand.u32 %v314, 127
        %v316 = vadd.s32 %v315, 128
        %vm317 = vcmp.lt.s32.totalorder %v315, 0
        %v318 = vsub.s32 0, %v315
        %v319 = vsel %vm317, %v318, %v315
        %v320 = vshrl.u32 %v319, 4
        %v321 = vand.u32 %v319, 15
        %v322 = vsub.s32 0, %v321
        %v323 = vsel %vm317, %v322, %v321
        %vm324 = vcmp.lt.s32.totalorder %v316, 0
        %v325 = vsub.s32 0, %v316
        %v326 = vsel %vm324, %v325, %v316
        %v327 = vshrl.u32 %v326, 4
        %v328 = vand.u32 %v326, 15
        %v329 = vsub.s32 0, %v328
        %v330 = vsel %vm324, %v329, %v328
        %vm331 = vcmp.ne.s32.totalorder %v323, 0
        %vm332 = vcmp.ne.s32.totalorder %v330, 0
        %vm333 = vcmp.lt.s32.totalorder %v323, 0
        %vm334 = vcmp.lt.s32.totalorder %v330, 0
        %vm335 = vmand %vm333, %vm331
        %vm336 = vmand %vm334, %vm332
        %v337 = vadd.s32 %v323, 16
        %v338 = vadd.s32 %v330, 16
        %v339 = vsel %vm335, %v337, %v323
        %v340 = vsel %vm336, %v338, %v330
        %vm341 = vcmp.gt.s32.totalorder %v339, 0
        %vm342 = vcmp.gt.s32.totalorder %v340, 0
        %vm343 = vcmp.lt.s32.totalorder %v339, 15
        %vm344 = vcmp.lt.s32.totalorder %v340, 15
        %345 = vst [vmem:[#allocation2] sm:$0xff] 0
        %vm346 = vcmask 273408
        %347 = vst.msk [vmem:[#allocation2 + $0x8] sm:$0xf] %vm346, 0
        %348 = vst [vmem:[#allocation2 + $0xc] sm:$0xff] 0
        %349 = vst.msk [vmem:[#allocation2 + $0x14] sm:$0xf] %vm346, 0
        %v350 = vpack.c.bf16 %v312, %v310
        %v351 = vpack.c.bf16 %v313, %v311
        %v354 = vunpack.c.l.b16 %v350
        %v355 = vunpack.c.l.b16 %v351
        %v356 = vunpack.c.h.b16 %v350
        %v357 = vunpack.c.h.b16 %v351
        %v358 = vpack.c.b16 %v355, %v354
        %v359 = vpack.c.b16 %v357, %v356
        %360 = vrot.lane.b32.xlu0 %v358, 17
        %v361 = vpop.permute.xlu0 %360
        %362 = vrot.lane.b32.xlu0 %v359, 17
        %v363 = vpop.permute.xlu0 %362
        %v364 = vrot.slane %v361, 4
        %v365 = vrot.slane %v363, 4
        %vm366 = vcmask 138240
        %v367 = vsel %vm366, %v364, %v361
        %v368 = vsel %vm366, %v365, %v363
        %vm373 = vcmask 1043592
        %vm374 = vcmask 1047556
        %vm375 = vmor %vm374, %vm373
        %376 = vst.msk [vmem:[#allocation2] sm:$0xff] %vm375, %v367
        %vm377 = vcmask 134144
        %378 = vst.msk [vmem:[#allocation2 + $0x8] sm:$0xf] %vm377, %v364
        %379 = vst.msk [vmem:[#allocation2 + $0xc] sm:$0xff] %vm375, %v368
        %380 = vst.msk [vmem:[#allocation2 + $0x14] sm:$0xf] %vm377, %v365
        %v381 = vld [vmem:[#allocation2] sm:$0xff]
        %v382 = vld [vmem:[#allocation2 + $0xc] sm:$0xff]
        %v383 = vsel %vm341, 1, 0
        %v384 = vsel %vm342, 1, 0
        %vm385 = vcmp.eq.s32.totalorder %v383, 1
        %vm386 = vcmp.eq.s32.totalorder %v384, 1
        %vm387 = vmpackc.low %vm386, %vm385
        %v388 = vsel %vm387, %v381, 0
        %v389 = vsel %vm387, %v382, 0
        %v390 = vld [vmem:[#allocation2 + $0x8] sm:$0xf]
        %v391 = vld [vmem:[#allocation2 + $0x14] sm:$0xf]
        %v392 = vsel %vm343, 1, 0
        %v393 = vsel %vm344, 1, 0
        %vm394 = vcmp.eq.s32.totalorder %v392, 1
        %vm395 = vcmp.eq.s32.totalorder %v393, 1
        %vm396 = vmpackc.low %vm395, %vm394
        %v397 = vsel %vm396, 65537, 0
        %398 = vrot.lane.b32.xlu0 %v397, 2
        %v399 = vpop.permute.xlu0 %398
        %v400 = vrot.slane %v399, 4
        %vm401 = vcmask 15360
        %v402 = vsel %vm401, %v400, %v399
        %vm403 = vcmp.ne.s16.totalorder %v402, 0
        %vm404 = vcmp.ne.s16.totalorder %v400, 0
        %v405 = vsel %vm403, %v381, 0
        %v406 = vsel %vm404, %v390, 0
        %v407 = vsel %vm403, %v382, 0
        %v408 = vsel %vm404, %v391, 0
        %v409 = vsel %vm387, 65537, 0
        %410 = vrot.lane.b32.xlu0 %v409, 16
        %v411 = vpop.permute.xlu0 %410
        %v412 = vrot.slane %v411, 4
        %vm413 = vcmask 130048
        %v414 = vsel %vm413, %v412, %v411
        %vm415 = vcmp.ne.s16.totalorder %v414, 0
        %vm416 = vcmp.ne.s16.totalorder %v412, 0
        %v417 = vsel %vm415, %v381, 0
        %v418 = vsel %vm416, %v390, 0
        %v419 = vsel %vm415, %v382, 0
        %v420 = vsel %vm416, %v391, 0
        %421 = vrot.lane.b32.xlu0 %v397, 18
        %v422 = vpop.permute.xlu0 %421
        %v423 = vrot.slane %v422, 4
        %vm424 = vcmask 146432
        %v425 = vsel %vm424, %v423, %v422
        %vm426 = vcmp.ne.s16.totalorder %v425, 0
        %vm427 = vcmp.ne.s16.totalorder %v423, 0
        %v428 = vsel %vm426, %v381, 0
        %v429 = vsel %vm427, %v390, 0
        %v430 = vsel %vm426, %v382, 0
        %v431 = vsel %vm427, %v391, 0
        %432 = vrot.lane.b32.xlu0 %v409, 32
        %v433 = vpop.permute.xlu0 %432
        %v434 = vrot.slane %v433, 4
        %vm435 = vcmask 261120
        %v436 = vsel %vm435, %v434, %v433
        %vm437 = vcmp.ne.s16.totalorder %v436, 0
        %vm438 = vcmp.ne.s16.totalorder %v434, 0
        %v439 = vsel %vm437, %v381, 0
        %v440 = vsel %vm438, %v390, 0
        %v441 = vsel %vm437, %v382, 0
        %v442 = vsel %vm438, %v391, 0
        %443 = vrot.lane.b32.xlu0 %v397, 34
        %v444 = vpop.permute.xlu0 %443
        %v445 = vrot.slane %v444, 4
        %vm446 = vcmask 277504
        %v447 = vsel %vm446, %v445, %v444
        %vm448 = vcmp.ne.s16.totalorder %v447, 0
        %vm449 = vcmp.ne.s16.totalorder %v445, 0
        %v450 = vsel %vm448, %v381, 0
        %v451 = vsel %vm449, %v390, 0
        %v452 = vsel %vm448, %v382, 0
        %v453 = vsel %vm449, %v391, 0
        %v456 = vunpack.c.l.b16 %v388
        %v457 = vunpack.c.h.b16 %v388
        %v458 = vunpack.c.l.b16 %v389
        %v459 = vunpack.c.h.b16 %v389
        %v460 = vpack.c.b16 %v458, %v456
        %v461 = vpack.c.b16 %v459, %v457
        %v468 = vunpack.c.l.b16 %v381
        %v469 = vunpack.c.h.b16 %v381
        %v470 = vunpack.c.l.b16 %v390
        %v471 = vunpack.c.l.b16 %v382
        %v472 = vunpack.c.h.b16 %v382
        %v473 = vunpack.c.l.b16 %v391
        %v474 = vpack.c.b16 %v471, %v468
        %v475 = vpack.c.b16 %v472, %v469
        %v476 = vpack.c.b16 %v473, %v470
        %477 = vrot.lane.b32.xlu0 %v474, 127
        %v478 = vpop.permute.xlu0 %477
        %479 = vrot.lane.b32.xlu0 %v475, 127
        %v480 = vpop.permute.xlu0 %479
        %481 = vrot.lane.b32.xlu0 %v476, 127
        %v482 = vpop.permute.xlu0 %481
        %vm483 = vcmask 1039360
        %v484 = vsel %vm483, %v478, %v480
        %v485 = vsel %vm483, %v480, %v482
        %v492 = vunpack.c.l.b16 %v405
        %v493 = vunpack.c.h.b16 %v405
        %v494 = vunpack.c.l.b16 %v406
        %v495 = vunpack.c.l.b16 %v407
        %v496 = vunpack.c.h.b16 %v407
        %v497 = vunpack.c.l.b16 %v408
        %v498 = vpack.c.b16 %v495, %v492
        %v499 = vpack.c.b16 %v496, %v493
        %v500 = vpack.c.b16 %v497, %v494
        %501 = vrot.lane.b32.xlu0 %v498, 126
        %v502 = vpop.permute.xlu0 %501
        %503 = vrot.lane.b32.xlu0 %v499, 126
        %v504 = vpop.permute.xlu0 %503
        %505 = vrot.lane.b32.xlu0 %v500, 126
        %v506 = vpop.permute.xlu0 %505
        %vm507 = vcmask 1031168
        %v508 = vsel %vm507, %v502, %v504
        %v509 = vsel %vm507, %v504, %v506
        %v516 = vunpack.c.l.b16 %v417
        %v517 = vunpack.c.h.b16 %v417
        %v518 = vunpack.c.l.b16 %v418
        %v519 = vunpack.c.l.b16 %v419
        %v520 = vunpack.c.h.b16 %v419
        %v521 = vunpack.c.l.b16 %v420
        %v522 = vpack.c.b16 %v519, %v516
        %v523 = vpack.c.b16 %v520, %v517
        %v524 = vpack.c.b16 %v521, %v518
        %525 = vrot.lane.b32.xlu0 %v522, 112
        %v526 = vpop.permute.xlu0 %525
        %527 = vrot.lane.b32.xlu0 %v523, 112
        %v528 = vpop.permute.xlu0 %527
        %529 = vrot.lane.b32.xlu0 %v524, 112
        %v530 = vpop.permute.xlu0 %529
        %vm531 = vcmask 916480
        %v532 = vsel %vm531, %v526, %v528
        %v533 = vsel %vm531, %v528, %v530
        %536 = vrot.lane.b32.xlu0 %v474, 111
        %v537 = vpop.permute.xlu0 %536
        %538 = vrot.lane.b32.xlu0 %v475, 111
        %v539 = vpop.permute.xlu0 %538
        %540 = vrot.lane.b32.xlu0 %v476, 111
        %v541 = vpop.permute.xlu0 %540
        %vm542 = vcmask 908288
        %v543 = vsel %vm542, %v537, %v539
        %v544 = vsel %vm542, %v539, %v541
        %v551 = vunpack.c.l.b16 %v428
        %v552 = vunpack.c.h.b16 %v428
        %v553 = vunpack.c.l.b16 %v429
        %v554 = vunpack.c.l.b16 %v430
        %v555 = vunpack.c.h.b16 %v430
        %v556 = vunpack.c.l.b16 %v431
        %v557 = vpack.c.b16 %v554, %v551
        %v558 = vpack.c.b16 %v555, %v552
        %v559 = vpack.c.b16 %v556, %v553
        %560 = vrot.lane.b32.xlu0 %v557, 110
        %v561 = vpop.permute.xlu0 %560
        %562 = vrot.lane.b32.xlu0 %v558, 110
        %v563 = vpop.permute.xlu0 %562
        %564 = vrot.lane.b32.xlu0 %v559, 110
        %v565 = vpop.permute.xlu0 %564
        %vm566 = vcmask 900096
        %v567 = vsel %vm566, %v561, %v563
        %v568 = vsel %vm566, %v563, %v565
        %v575 = vunpack.c.l.b16 %v439
        %v576 = vunpack.c.h.b16 %v439
        %v577 = vunpack.c.l.b16 %v440
        %v578 = vunpack.c.l.b16 %v441
        %v579 = vunpack.c.h.b16 %v441
        %v580 = vunpack.c.l.b16 %v442
        %v581 = vpack.c.b16 %v578, %v575
        %v582 = vpack.c.b16 %v579, %v576
        %v583 = vpack.c.b16 %v580, %v577
        %584 = vrot.lane.b32.xlu0 %v581, 96
        %v585 = vpop.permute.xlu0 %584
        %586 = vrot.lane.b32.xlu0 %v582, 96
        %v587 = vpop.permute.xlu0 %586
        %588 = vrot.lane.b32.xlu0 %v583, 96
        %v589 = vpop.permute.xlu0 %588
        %vm590 = vcmask 785408
        %v591 = vsel %vm590, %v585, %v587
        %v592 = vsel %vm590, %v587, %v589
        %595 = vrot.lane.b32.xlu0 %v474, 95
        %v596 = vpop.permute.xlu0 %595
        %597 = vrot.lane.b32.xlu0 %v475, 95
        %v598 = vpop.permute.xlu0 %597
        %599 = vrot.lane.b32.xlu0 %v476, 95
        %v600 = vpop.permute.xlu0 %599
        %vm601 = vcmask 777216
        %v602 = vsel %vm601, %v596, %v598
        %v603 = vsel %vm601, %v598, %v600
        %v610 = vunpack.c.l.b16 %v450
        %v611 = vunpack.c.h.b16 %v450
        %v612 = vunpack.c.l.b16 %v451
        %v613 = vunpack.c.l.b16 %v452
        %v614 = vunpack.c.h.b16 %v452
        %v615 = vunpack.c.l.b16 %v453
        %v616 = vpack.c.b16 %v613, %v610
        %v617 = vpack.c.b16 %v614, %v611
        %v618 = vpack.c.b16 %v615, %v612
        %619 = vrot.lane.b32.xlu0 %v616, 94
        %v620 = vpop.permute.xlu0 %619
        %621 = vrot.lane.b32.xlu0 %v617, 94
        %v622 = vpop.permute.xlu0 %621
        %623 = vrot.lane.b32.xlu0 %v618, 94
        %v624 = vpop.permute.xlu0 %623
        %vm625 = vcmask 769024
        %v626 = vsel %vm625, %v620, %v622
        %v627 = vsel %vm625, %v622, %v624
        %v630 = vld [vmem:[#allocation3] sm:$0xff]
        %v631 = vld [vmem:[#allocation3 + $0x8] sm:$0xff]
        %v634 = vunpack.c.l.b16 %v630
        %v635 = vunpack.c.h.b16 %v630
        %v636 = vunpack.c.l.b16 %v631
        %v637 = vunpack.c.h.b16 %v631
        %v638 = vpack.c.b16 %v636, %v634
        %v639 = vpack.c.b16 %v637, %v635
        %vm641 = vcmask 130048
        %v643 = vsel %vm641, %v639, 0
        %645 = vmatprep.subr.bf16.mxu0 %v603
        %646 = vmatpush1.bf16.msra.mxu0 %v602
        %647 = vmatprep.subr.bf16.mxu0 %v592
        %648 = vmatpush1.bf16.msra.mxu0 %v591
        %649 = vmatprep.subr.bf16.mxu0 %v568
        %650 = vmatpush1.bf16.msra.mxu0 %v567
        %651 = vmatprep.subr.bf16.mxu0 %v544
        %652 = vmatpush1.bf16.msra.mxu0 %v543
        %653 = vmatprep.subr.bf16.mxu0 %v533
        %654 = vmatpush1.bf16.msra.mxu0 %v532
        %655 = vmatprep.subr.bf16.mxu0 %v509
        %656 = vmatpush1.bf16.msra.mxu0 %v508
        %657 = vmatprep.subr.bf16.mxu0 %v485
        %658 = vmatpush1.bf16.msra.mxu0 %v484
        %659 = vmatprep.subr.bf16.mxu0 %v461
        %660 = vmatpush1.bf16.msra.mxu0 %v460
        %661 = vmatprep.subr.bf16.mxu0 0
        %662 = vmatpush2.bf16.msra.mxu0 0
        %663 = vmatprep.subr.bf16.mxu0 0
        %664 = vmatpush2.bf16.msra.mxu0 0
        %665 = vmatprep.subr.bf16.mxu0 0
        %666 = vmatpush2.bf16.msra.mxu0 0
        %667 = vmatprep.subr.bf16.mxu0 0
        %668 = vmatpush2.bf16.msra.mxu0 0
        %669 = vmatprep.subr.bf16.mxu0 0
        %670 = vmatpush2.bf16.msra.mxu0 0
        %671 = vmatprep.subr.bf16.mxu0 0
        %672 = vmatpush2.bf16.msra.mxu0 0
        %673 = vmatprep.subr.bf16.mxu0 0
        %674 = vmatpush2.bf16.msra.mxu0 0
        %675 = vmatprep.subr.bf16.mxu0 %v627
        %676 = vmatpush2.bf16.msra.mxu0 %v626
        %677 = vmatprep.mubr.bf16.mxu0 %v643
        %678 = vmatmul.mubr.bf16.gmra.mxu0 %v638
        %v679 = vpop.f32.mrf.mxu0
        %v680 = vadd.f32 0.0, %v679
        %v681 = vpop.f32.mrf.mxu0
        %v682 = vadd.f32 0.0, %v681
        %v683 = vpop.f32.mrf.mxu0
        %v684 = vadd.f32 0.0, %v683
        %v685 = vpop.f32.mrf.mxu0
        %v686 = vadd.f32 0.0, %v685
        %687 = vdwg.mxu0
        %v688 = vld [vmem:[%s2] sm:$0xff]
        %v689 = vld [vmem:[%s2 + $0x8] sm:$0xff]
        %691 = vset.pattern.permute.xlu0 0
        %692 = vperm.xlu0 %691, %v688
        %v693 = vpop.permute.xlu0 %692
        %696 = vset.pattern.permute.xlu0 0
        %697 = vperm.xlu0 %696, %v689
        %v698 = vpop.permute.xlu0 %697
        %v700 = vmul.f32 %v680, %v693
        %v701 = vmul.f32 %v682, %v693
        %v702 = vmul.f32 %v684, %v698
        %v703 = vmul.f32 %v686, %v698
        %v704 = vld [vmem:[%s3] sm:$0xff]
        %v705 = vld [vmem:[%s3 + $0x8] sm:$0xff]
        %707 = vset.pattern.permute.xlu0 0
        %708 = vperm.xlu0 %707, %v704
        %v709 = vpop.permute.xlu0 %708
        %712 = vset.pattern.permute.xlu0 0
        %713 = vperm.xlu0 %712, %v705
        %v714 = vpop.permute.xlu0 %713
        %v716 = vadd.f32 %v700, %v709
        %v717 = vadd.f32 %v701, %v709
        %v718 = vadd.f32 %v702, %v714
        %v719 = vadd.f32 %v703, %v714
        %v720 = vmax.f32 %v716, 0.0
        %v721 = vmax.f32 %v717, 0.0
        %v722 = vmax.f32 %v718, 0.0
        %v723 = vmax.f32 %v719, 0.0
        %v724 = vpack.c.bf16 %v722, %v720
        %v725 = vpack.c.bf16 %v723, %v721
        %v728 = vunpack.c.l.b16 %v724
        %v729 = vunpack.c.l.b16 %v725
        %v730 = vunpack.c.h.b16 %v724
        %v731 = vunpack.c.h.b16 %v725
        %v732 = vpack.c.b16 %v729, %v728
        %v733 = vpack.c.b16 %v731, %v730
        %734 = vrot.lane.b32.xlu0 %v732, 17
        %v735 = vpop.permute.xlu0 %734
        %736 = vrot.lane.b32.xlu0 %v733, 17
        %v737 = vpop.permute.xlu0 %736
        %v738 = vrot.slane %v735, 4
        %v739 = vrot.slane %v737, 4
        %v740 = vsel %vm366, %v738, %v735
        %v741 = vsel %vm366, %v739, %v737
        %746 = vst.msk [vmem:[#allocation2] sm:$0xff] %vm375, %v740
        %747 = vst.msk [vmem:[#allocation2 + $0x8] sm:$0xf] %vm377, %v738
        %748 = vst.msk [vmem:[#allocation2 + $0xc] sm:$0xff] %vm375, %v741
        %749 = vst.msk [vmem:[#allocation2 + $0x14] sm:$0xf] %vm377, %v739
        %v750 = vld [vmem:[#allocation2] sm:$0xff]
        %v751 = vld [vmem:[#allocation2 + $0xc] sm:$0xff]
        %v752 = vsel %vm387, %v750, 0
        %v753 = vsel %vm387, %v751, 0
        %v754 = vld [vmem:[#allocation2 + $0x8] sm:$0xf]
        %v755 = vld [vmem:[#allocation2 + $0x14] sm:$0xf]
        %v756 = vsel %vm403, %v750, 0
        %v757 = vsel %vm404, %v754, 0
        %v758 = vsel %vm403, %v751, 0
        %v759 = vsel %vm404, %v755, 0
        %v760 = vsel %vm415, %v750, 0
        %v761 = vsel %vm416, %v754, 0
        %v762 = vsel %vm415, %v751, 0
        %v763 = vsel %vm416, %v755, 0
        %v764 = vsel %vm426, %v750, 0
        %v765 = vsel %vm427, %v754, 0
        %v766 = vsel %vm426, %v751, 0
        %v767 = vsel %vm427, %v755, 0
        %v768 = vsel %vm437, %v750, 0
        %v769 = vsel %vm438, %v754, 0
        %v770 = vsel %vm437, %v751, 0
        %v771 = vsel %vm438, %v755, 0
        %v772 = vsel %vm448, %v750, 0
        %v773 = vsel %vm449, %v754, 0
        %v774 = vsel %vm448, %v751, 0
        %v775 = vsel %vm449, %v755, 0
        %v778 = vunpack.c.l.b16 %v752
        %v779 = vunpack.c.h.b16 %v752
        %v780 = vunpack.c.l.b16 %v753
        %v781 = vunpack.c.h.b16 %v753
        %v782 = vpack.c.b16 %v780, %v778
        %v783 = vpack.c.b16 %v781, %v779
        %v790 = vunpack.c.l.b16 %v750
        %v791 = vunpack.c.h.b16 %v750
        %v792 = vunpack.c.l.b16 %v754
        %v793 = vunpack.c.l.b16 %v751
        %v794 = vunpack.c.h.b16 %v751
        %v795 = vunpack.c.l.b16 %v755
        %v796 = vpack.c.b16 %v793, %v790
        %v797 = vpack.c.b16 %v794, %v791
        %v798 = vpack.c.b16 %v795, %v792
        %799 = vrot.lane.b32.xlu0 %v796, 127
        %v800 = vpop.permute.xlu0 %799
        %801 = vrot.lane.b32.xlu0 %v797, 127
        %v802 = vpop.permute.xlu0 %801
        %803 = vrot.lane.b32.xlu0 %v798, 127
        %v804 = vpop.permute.xlu0 %803
        %v805 = vsel %vm483, %v800, %v802
        %v806 = vsel %vm483, %v802, %v804
        %v813 = vunpack.c.l.b16 %v756
        %v814 = vunpack.c.h.b16 %v756
        %v815 = vunpack.c.l.b16 %v757
        %v816 = vunpack.c.l.b16 %v758
        %v817 = vunpack.c.h.b16 %v758
        %v818 = vunpack.c.l.b16 %v759
        %v819 = vpack.c.b16 %v816, %v813
        %v820 = vpack.c.b16 %v817, %v814
        %v821 = vpack.c.b16 %v818, %v815
        %822 = vrot.lane.b32.xlu0 %v819, 126
        %v823 = vpop.permute.xlu0 %822
        %824 = vrot.lane.b32.xlu0 %v820, 126
        %v825 = vpop.permute.xlu0 %824
        %826 = vrot.lane.b32.xlu0 %v821, 126
        %v827 = vpop.permute.xlu0 %826
        %v828 = vsel %vm507, %v823, %v825
        %v829 = vsel %vm507, %v825, %v827
        %v836 = vunpack.c.l.b16 %v760
        %v837 = vunpack.c.h.b16 %v760
        %v838 = vunpack.c.l.b16 %v761
        %v839 = vunpack.c.l.b16 %v762
        %v840 = vunpack.c.h.b16 %v762
        %v841 = vunpack.c.l.b16 %v763
        %v842 = vpack.c.b16 %v839, %v836
        %v843 = vpack.c.b16 %v840, %v837
        %v844 = vpack.c.b16 %v841, %v838
        %845 = vrot.lane.b32.xlu0 %v842, 112
        %v846 = vpop.permute.xlu0 %845
        %847 = vrot.lane.b32.xlu0 %v843, 112
        %v848 = vpop.permute.xlu0 %847
        %849 = vrot.lane.b32.xlu0 %v844, 112
        %v850 = vpop.permute.xlu0 %849
        %v851 = vsel %vm531, %v846, %v848
        %v852 = vsel %vm531, %v848, %v850
        %855 = vrot.lane.b32.xlu0 %v796, 111
        %v856 = vpop.permute.xlu0 %855
        %857 = vrot.lane.b32.xlu0 %v797, 111
        %v858 = vpop.permute.xlu0 %857
        %859 = vrot.lane.b32.xlu0 %v798, 111
        %v860 = vpop.permute.xlu0 %859
        %v861 = vsel %vm542, %v856, %v858
        %v862 = vsel %vm542, %v858, %v860
        %v869 = vunpack.c.l.b16 %v764
        %v870 = vunpack.c.h.b16 %v764
        %v871 = vunpack.c.l.b16 %v765
        %v872 = vunpack.c.l.b16 %v766
        %v873 = vunpack.c.h.b16 %v766
        %v874 = vunpack.c.l.b16 %v767
        %v875 = vpack.c.b16 %v872, %v869
        %v876 = vpack.c.b16 %v873, %v870
        %v877 = vpack.c.b16 %v874, %v871
        %878 = vrot.lane.b32.xlu0 %v875, 110
        %v879 = vpop.permute.xlu0 %878
        %880 = vrot.lane.b32.xlu0 %v876, 110
        %v881 = vpop.permute.xlu0 %880
        %882 = vrot.lane.b32.xlu0 %v877, 110
        %v883 = vpop.permute.xlu0 %882
        %v884 = vsel %vm566, %v879, %v881
        %v885 = vsel %vm566, %v881, %v883
        %v892 = vunpack.c.l.b16 %v768
        %v893 = vunpack.c.h.b16 %v768
        %v894 = vunpack.c.l.b16 %v769
        %v895 = vunpack.c.l.b16 %v770
        %v896 = vunpack.c.h.b16 %v770
        %v897 = vunpack.c.l.b16 %v771
        %v898 = vpack.c.b16 %v895, %v892
        %v899 = vpack.c.b16 %v896, %v893
        %v900 = vpack.c.b16 %v897, %v894
        %901 = vrot.lane.b32.xlu0 %v898, 96
        %v902 = vpop.permute.xlu0 %901
        %903 = vrot.lane.b32.xlu0 %v899, 96
        %v904 = vpop.permute.xlu0 %903
        %905 = vrot.lane.b32.xlu0 %v900, 96
        %v906 = vpop.permute.xlu0 %905
        %v907 = vsel %vm590, %v902, %v904
        %v908 = vsel %vm590, %v904, %v906
        %911 = vrot.lane.b32.xlu0 %v796, 95
        %v912 = vpop.permute.xlu0 %911
        %913 = vrot.lane.b32.xlu0 %v797, 95
        %v914 = vpop.permute.xlu0 %913
        %915 = vrot.lane.b32.xlu0 %v798, 95
        %v916 = vpop.permute.xlu0 %915
        %v917 = vsel %vm601, %v912, %v914
        %v918 = vsel %vm601, %v914, %v916
        %v925 = vunpack.c.l.b16 %v772
        %v926 = vunpack.c.h.b16 %v772
        %v927 = vunpack.c.l.b16 %v773
        %v928 = vunpack.c.l.b16 %v774
        %v929 = vunpack.c.h.b16 %v774
        %v930 = vunpack.c.l.b16 %v775
        %v931 = vpack.c.b16 %v928, %v925
        %v932 = vpack.c.b16 %v929, %v926
        %v933 = vpack.c.b16 %v930, %v927
        %934 = vrot.lane.b32.xlu0 %v931, 94
        %v935 = vpop.permute.xlu0 %934
        %936 = vrot.lane.b32.xlu0 %v932, 94
        %v937 = vpop.permute.xlu0 %936
        %938 = vrot.lane.b32.xlu0 %v933, 94
        %v939 = vpop.permute.xlu0 %938
        %v940 = vsel %vm625, %v935, %v937
        %v941 = vsel %vm625, %v937, %v939
        %v944 = vld [vmem:[#allocation6] sm:$0xff]
        %v945 = vld [vmem:[#allocation6 + $0x8] sm:$0xff]
        %v948 = vunpack.c.l.b16 %v944
        %v949 = vunpack.c.h.b16 %v944
        %v950 = vunpack.c.l.b16 %v945
        %v951 = vunpack.c.h.b16 %v945
        %v952 = vpack.c.b16 %v950, %v948
        %v953 = vpack.c.b16 %v951, %v949
        %v956 = vsel %vm641, %v953, 0
        %958 = vmatprep.subr.bf16.mxu0 %v918
        %959 = vmatpush1.bf16.msra.mxu0 %v917
        %960 = vmatprep.subr.bf16.mxu0 %v908
        %961 = vmatpush1.bf16.msra.mxu0 %v907
        %962 = vmatprep.subr.bf16.mxu0 %v885
        %963 = vmatpush1.bf16.msra.mxu0 %v884
        %964 = vmatprep.subr.bf16.mxu0 %v862
        %965 = vmatpush1.bf16.msra.mxu0 %v861
        %966 = vmatprep.subr.bf16.mxu0 %v852
        %967 = vmatpush1.bf16.msra.mxu0 %v851
        %968 = vmatprep.subr.bf16.mxu0 %v829
        %969 = vmatpush1.bf16.msra.mxu0 %v828
        %970 = vmatprep.subr.bf16.mxu0 %v806
        %971 = vmatpush1.bf16.msra.mxu0 %v805
        %972 = vmatprep.subr.bf16.mxu0 %v783
        %973 = vmatpush1.bf16.msra.mxu0 %v782
        %974 = vmatprep.subr.bf16.mxu0 0
        %975 = vmatpush2.bf16.msra.mxu0 0
        %976 = vmatprep.subr.bf16.mxu0 0
        %977 = vmatpush2.bf16.msra.mxu0 0
        %978 = vmatprep.subr.bf16.mxu0 0
        %979 = vmatpush2.bf16.msra.mxu0 0
        %980 = vmatprep.subr.bf16.mxu0 0
        %981 = vmatpush2.bf16.msra.mxu0 0
        %982 = vmatprep.subr.bf16.mxu0 0
        %983 = vmatpush2.bf16.msra.mxu0 0
        %984 = vmatprep.subr.bf16.mxu0 0
        %985 = vmatpush2.bf16.msra.mxu0 0
        %986 = vmatprep.subr.bf16.mxu0 0
        %987 = vmatpush2.bf16.msra.mxu0 0
        %988 = vmatprep.subr.bf16.mxu0 %v941
        %989 = vmatpush2.bf16.msra.mxu0 %v940
        %990 = vmatprep.mubr.bf16.mxu0 %v956
        %991 = vmatmul.mubr.bf16.gmra.mxu0 %v952
        %v992 = vpop.f32.mrf.mxu0
        %v993 = vadd.f32 0.0, %v992
        %v994 = vpop.f32.mrf.mxu0
        %v995 = vadd.f32 0.0, %v994
        %v996 = vpop.f32.mrf.mxu0
        %v997 = vadd.f32 0.0, %v996
        %v998 = vpop.f32.mrf.mxu0
        %v999 = vadd.f32 0.0, %v998
        %1000 = vdwg.mxu0
        %v1001 = vld [vmem:[%s5] sm:$0xff]
        %v1002 = vld [vmem:[%s5 + $0x8] sm:$0xff]
        %1004 = vset.pattern.permute.xlu0 0
        %1005 = vperm.xlu0 %1004, %v1001
        %v1006 = vpop.permute.xlu0 %1005
        %1009 = vset.pattern.permute.xlu0 0
        %1010 = vperm.xlu0 %1009, %v1002
        %v1011 = vpop.permute.xlu0 %1010
        %v1013 = vmul.f32 %v993, %v1006
        %v1014 = vmul.f32 %v995, %v1006
        %v1015 = vmul.f32 %v997, %v1011
        %v1016 = vmul.f32 %v999, %v1011
        %v1017 = vld [vmem:[%s6] sm:$0xff]
        %v1018 = vld [vmem:[%s6 + $0x8] sm:$0xff]
        %1020 = vset.pattern.permute.xlu0 0
        %1021 = vperm.xlu0 %1020, %v1017
        %v1022 = vpop.permute.xlu0 %1021
        %1025 = vset.pattern.permute.xlu0 0
        %1026 = vperm.xlu0 %1025, %v1018
        %v1027 = vpop.permute.xlu0 %1026
        %v1029 = vadd.f32 %v1013, %v1022
        %v1030 = vadd.f32 %v1014, %v1022
        %v1031 = vadd.f32 %v1015, %v1027
        %v1032 = vadd.f32 %v1016, %v1027
        %v1033 = vadd.f32 %v1029, %v310
        %v1034 = vadd.f32 %v1030, %v311
        %v1035 = vadd.f32 %v1031, %v312
        %v1036 = vadd.f32 %v1032, %v313
        %v1037 = vmax.f32 %v1033, 0.0
        %v1038 = vmax.f32 %v1034, 0.0
        %v1039 = vmax.f32 %v1035, 0.0
        %v1040 = vmax.f32 %v1036, 0.0
        %1041 = vst [vmem:[%s301] sm:$0xff] %v1037
        %1042 = vst [vmem:[%s301 + $0x8] sm:$0xff] %v1038
        %1043 = vst [vmem:[%s301 + $0x10] sm:$0xff] %v1039
        %1044 = vst [vmem:[%s301 + $0x18] sm:$0xff] %v1040
        %s1045 = sand.u32 %s183, 1
        %s1046 = scalar_lea.sflag [#allocation5], %s1045
        %s1047 = sand.u32 %s183, 1
        %s1048 = smul.addr %s1047, 32
        %s1049 = scalar_lea.vmem [#allocation8], %s1048
        // Predicated region
        $region57: #{tpu_custom_call.1} parent=47 // pred_check
          %p1050 = pneg %p193
        $region58: #{tpu_custom_call.1} parent=47 // pred_check_branch
          %1052 = sbr.rel (%p1050) target = $region60
        $region59: #{tpu_custom_call.1} parent=47 // pred_region
          %s1054 = ssub.s32 512, 512
          %1055 = vsyncadd %s1046, %s1054
          %s1056 = smul.addr %s23, 4
          %s1057 = smul.addr %s1056, 128
          %s1058 = scalar_lea.hbm %s7, %s1057
          %s1059 = sshll.u32 %s1049, 4
          %s1060 = int_to_ptr.vmem [resolvable:$true] %s1059
          %1065 = dma.vmem_to_hbm [thread:$0]  %s1060, 512, %s1058, %s1046, 256, 256, 16
        $region60: #{tpu_custom_call.1} parent=47 // pred_fallthru
          _
      $region48: #{tpu_custom_call.1} parent=5 // pred_fallthru
        _
      %p1066 = scmp.le.s32.totalorder 2, %s18
      // Predicated region
      $region61: #{tpu_custom_call.1} parent=5 // pred_check
        %p1067 = pneg %p1066
      $region62: #{tpu_custom_call.1} parent=5 // pred_check_branch
        %1069 = sbr.rel (%p1067) target = $region64
      $region63: #{tpu_custom_call.1} parent=5 // pred_region
        %s1070 = ssub.s32 %s18, 2
        // Predicated region
        $region65: #{tpu_custom_call.1} parent=63 // pred_check
          %p1071 = pneg %p199
        $region66: #{tpu_custom_call.1} parent=63 // pred_check_branch
          %1073 = sbr.rel (%p1071) target = $region68
        $region67: #{tpu_custom_call.1} parent=63 // pred_region
          %s1074 = sand.u32 %s184, 1
          %s1075 = scalar_lea.sflag [#allocation5], %s1074
          %s1076 = sand.u32 %s184, 1
          %s1077 = smul.addr %s1076, 32
          %s1078 = scalar_lea.vmem [#allocation8], %s1077
          %1079 = dma.done %s1075, 512
        $region68: #{tpu_custom_call.1} parent=63 // pred_fallthru
          _
      $region64: #{tpu_custom_call.1} parent=5 // pred_fallthru
        _
    $region6: #{tpu_custom_call.1} parent=1 // loop_footer
      %s22 = sadd.s32 1, %s18
    $region7: #{tpu_custom_call.1} parent=1 // loop_footer_branch
      %17 = sbr.rel target = $region3
    $region8: #{tpu_custom_call.1} parent=1 // loop_exit
      _
    %1080 = vsyncpa [#allocation4], 1
    %s1081 = scalar_lea.sflag [#allocation4], 1
    %1082 = vsyncpa %s1081, 1
    %1083 = vsyncpa [#allocation7], 1
    %1084 = vsyncpa [#allocation5], 1
    %s1085 = scalar_lea.sflag [#allocation5], 1
    %1086 = vsyncpa %s1085, 1

</llo_original>
